<compile_context>
chip_gen: v7x
topology: tpu7x:2x2x1
jax: 0.10.0
libtpu: 0.0.40
codegen_flags: <defaults>
</compile_context>

<pallas_src>
import math

import jax
import jax.numpy as jnp
from jax.experimental import pallas as pl
from jax.experimental.pallas import tpu as pltpu


def _round_up(n: int, m: int) -> int:
    return (n + m - 1) // m * m


def _nbytes(shape, dtype) -> int:
    return math.prod(shape) * jnp.dtype(dtype).itemsize


def _mlp_kernel(x_ref, w12_ref, b12_ref, w3_ref, b3_ref, o_ref):
    x = x_ref[...]
    # Stage 1: one fused lane-dense MXU matmul -> (tb, 2*Hp), f32 accumulation.
    h12 = jnp.dot(x, w12_ref[...], preferred_element_type=jnp.float32)
    h12 = h12 + b12_ref[...]
    hp = h12.shape[-1] // 2            # static; multiple of 128 -> aligned slice
    h1 = h12[:, :hp]                   # l1(x)
    h2 = h12[:, hp:]                   # l2(x)
    gated = h1 * (h2 * jax.nn.sigmoid(h2))   # SiLU(l2(x)) * l1(x)
    # Stage 2: (tb, Hp) @ (Hp, Cp) -- only the real gated half feeds the MXU.
    out = jnp.dot(gated.astype(w3_ref.dtype), w3_ref[...],
                  preferred_element_type=jnp.float32)
    out = out + b3_ref[...]
    o_ref[...] = out.astype(o_ref.dtype)


def pack_params(params, *, compute_dtype=None):
    """Pack PyTorch-layout mlp weights ONCE (transpose + pad + cast).

    Do this at init time; mlp_forward reuses the packed arrays so no repacking
    traffic is paid per forward call.
    """
    w1, w2, w3 = params["w1"], params["w2"], params["w3"]
    H, F_in = w1.shape
    C = w3.shape[0]
    dt = compute_dtype if compute_dtype is not None else w1.dtype

    Hp = _round_up(H, 128)   # 128-aligned split point between the l1/l2 halves
    Cp = _round_up(C, 128)   # lane-dense output -> unmasked stores

    # Fused stage-1 weight: columns [0:H] -> l1, columns [Hp:Hp+H] -> l2.
    w12 = jnp.zeros((F_in, 2 * Hp), dt)
    w12 = w12.at[:, :H].set(w1.T.astype(dt))
    w12 = w12.at[:, Hp:Hp + H].set(w2.T.astype(dt))
    b12 = jnp.zeros((1, 2 * Hp), jnp.float32)
    b12 = b12.at[:, :H].set(params["b1"].astype(jnp.float32))
    b12 = b12.at[:, Hp:Hp + H].set(params["b2"].astype(jnp.float32))

    # Stage-2 weight only needs the real gated half: (Hp, Cp); padding rows /
    # columns are zero so hidden/class padding contributes exactly nothing.
    w3p = jnp.zeros((Hp, Cp), dt)
    w3p = w3p.at[:H, :C].set(w3.T.astype(dt))
    b3 = jnp.zeros((1, Cp), jnp.float32)
    b3 = b3.at[:, :C].set(params["b3"].astype(jnp.float32))

    return {"w12": w12, "b12": b12, "w3": w3p, "b3": b3,
            "num_cls": C, "in_features": F_in}


def mlp_forward(x, packed, *, tb=None, out_dtype=None):
    """x: (B, in_features). packed: result of pack_params()."""
    B, F_in = x.shape
    assert F_in == packed["in_features"]
    w12, b12, w3p, b3 = packed["w12"], packed["b12"], packed["w3"], packed["b3"]
    C = packed["num_cls"]
    Hp2 = w12.shape[1]          # 2 * Hp
    Hp = Hp2 // 2
    Cp = w3p.shape[1]
    dt = w12.dtype
    out_dtype = out_dtype if out_dtype is not None else x.dtype

    # Sublane-aligned batch tile; one grid step for small batches, 256-row
    # tiles (full MXU rows) beyond that so big batches split across v7x TCs.
    sub = 16 if dt == jnp.bfloat16 else 8
    if tb is None:
        tb = _round_up(B, sub) if B <= 256 else 256
    tb = max(sub, _round_up(tb, sub))

    Bp = _round_up(B, tb)
    xk = x.astype(dt)
    if Bp != B:
        xk = jnp.pad(xk, ((0, Bp - B), (0, 0)))

    grid = (Bp // tb,)
    const = lambda i: (0, 0)     # weights/biases: grid-invariant full blocks

    # VMEM budget: double-buffered x/out tiles + weight blocks + f32
    # intermediates, plus headroom (covers v5e's 16 MiB default scoped limit).
    need = (2 * (_nbytes((tb, F_in), dt) + _nbytes((tb, Cp), out_dtype))
            + 2 * (_nbytes(w12.shape, dt) + _nbytes(b12.shape, jnp.float32)
                   + _nbytes(w3p.shape, dt) + _nbytes(b3.shape, jnp.float32))
            + 3 * _nbytes((tb, Hp2), jnp.float32))
    vmem_limit = int(min(max(need + (4 << 20), 32 << 20), 100 << 20))

    out_padded = pl.pallas_call(
        _mlp_kernel,
        out_shape=jax.ShapeDtypeStruct((Bp, Cp), out_dtype),
        grid=grid,
        in_specs=[
            pl.BlockSpec((tb, F_in), lambda i: (i, 0)),   # x tile over batch
            pl.BlockSpec((F_in, Hp2), const),             # fused W1 || W2
            pl.BlockSpec((1, Hp2), const),                # fused b1 || b2
            pl.BlockSpec((Hp, Cp), const),                # W3 (real half only)
            pl.BlockSpec((1, Cp), const),                 # padded b3
        ],
        out_specs=pl.BlockSpec((tb, Cp), lambda i: (i, 0)),
        compiler_params=pltpu.CompilerParams(
            dimension_semantics=("parallel",),
            vmem_limit_bytes=vmem_limit),
    )(xk, w12, b12, w3p, b3)

    return out_padded[:B, :C]


def init_params(key, in_features, hidden_size, num_cls, dtype=jnp.float32):
    """Deterministic init mimicking nn.Linear's uniform(-1/sqrt(fan_in), +)."""
    ks = jax.random.split(key, 6)

    def lin(kw, kb, fan_in, fan_out):
        bound = 1.0 / (fan_in ** 0.5)
        w = jax.random.uniform(kw, (fan_out, fan_in), dtype, -bound, bound)
        b = jax.random.uniform(kb, (fan_out,), dtype, -bound, bound)
        return w, b

    w1, b1 = lin(ks[0], ks[1], in_features, hidden_size)
    w2, b2 = lin(ks[2], ks[3], in_features, hidden_size)
    w3, b3 = lin(ks[4], ks[5], hidden_size, num_cls)
    return {"w1": w1, "b1": b1, "w2": w2, "b2": b2, "w3": w3, "b3": b3}


def mlp_reference(x, p):
    """Pure-JAX reference matching the PyTorch forward exactly."""
    h1 = x @ p["w1"].T + p["b1"]
    h2 = x @ p["w2"].T + p["b2"]
    silu = h2 * jax.nn.sigmoid(h2)
    return (silu * h1) @ p["w3"].T + p["b3"]


if __name__ == "__main__":
    key = jax.random.PRNGKey(0)
    k_x, k_p = jax.random.split(key)

    # Shapes consistent with the module: hidden = 2 * in_features.
    B, in_features, num_cls = 16, 32, 16
    hidden_size = in_features * 2
    x = jax.random.normal(k_x, (B, in_features), dtype=jnp.float32)
    params = init_params(k_p, in_features, hidden_size, num_cls)

    ref = mlp_reference(x, params)

    # f32 path (bit-faithful to the PyTorch head).
    packed = pack_params(params)                       # pack ONCE, reuse per call
    out = jax.block_until_ready(mlp_forward(x, packed))
    assert out.shape == (B, num_cls)
    assert jnp.allclose(out, ref, atol=1e-4, rtol=1e-4), "f32 mismatch vs reference"

    # bf16 compute path (recommended on v6e/v7x): half weight bytes, f32 accum.
    packed_bf16 = pack_params(params, compute_dtype=jnp.bfloat16)
    out_bf16 = jax.block_until_ready(mlp_forward(x, packed_bf16))
    assert out_bf16.shape == (B, num_cls)
    assert jnp.allclose(out_bf16.astype(jnp.float32), ref, atol=2e-1, rtol=2e-1), \
        "bf16 mismatch vs reference"

    print("KERNEL_OK")
</pallas_src>

<mosaic_0001>
module attributes {stable_mosaic.version = 11 : i64} {
  func.func @_mlp_kernel(%arg0: i32, %arg1: memref<16x32xf32, #tpu.memory_space<vmem>>, %arg2: memref<32x256xf32, #tpu.memory_space<vmem>>, %arg3: memref<1x256xf32, #tpu.memory_space<vmem>>, %arg4: memref<128x128xf32, #tpu.memory_space<vmem>>, %arg5: memref<1x128xf32, #tpu.memory_space<vmem>>, %arg6: memref<16x128xf32, #tpu.memory_space<vmem>>) attributes {dimension_semantics = [#tpu.dimension_semantics<parallel>], iteration_bounds = array<i64: 1>, scalar_prefetch = 0 : i64, scratch_operands = 0 : i64, tpu.core_type = #tpu.core_type<tc>, window_params = [{transform_indices = @transform_0, window_bounds = array<i64: 16, 32>}, {pipeline_mode = #tpu.pipeline_mode<synchronous>, transform_indices = @transform_1, window_bounds = array<i64: 32, 256>}, {pipeline_mode = #tpu.pipeline_mode<synchronous>, transform_indices = @transform_2, window_bounds = array<i64: 1, 256>}, {pipeline_mode = #tpu.pipeline_mode<synchronous>, transform_indices = @transform_3, window_bounds = array<i64: 128, 128>}, {pipeline_mode = #tpu.pipeline_mode<synchronous>, transform_indices = @transform_4, window_bounds = array<i64: 1, 128>}, {transform_indices = @transform_5, window_bounds = array<i64: 16, 128>}]} {
    %c0 = arith.constant 0 : index
    %c0_0 = arith.constant 0 : index
    %0 = vector.load %arg1[%c0, %c0_0] : memref<16x32xf32, #tpu.memory_space<vmem>>, vector<16x32xf32>
    %c0_1 = arith.constant 0 : index
    %c0_2 = arith.constant 0 : index
    %1 = vector.load %arg2[%c0_1, %c0_2] : memref<32x256xf32, #tpu.memory_space<vmem>>, vector<32x256xf32>
    %cst = arith.constant dense<0.000000e+00> : vector<16x256xf32>
    %2 = tpu.matmul %0, %1, %cst {dimension_numbers = #tpu.dot_dimension_numbers<[1], [0], [0], [1], [0, 0, 1, 1], [], []>} : vector<16x32xf32>, vector<32x256xf32>, vector<16x256xf32> -> vector<16x256xf32>
    %c0_3 = arith.constant 0 : index
    %c0_4 = arith.constant 0 : index
    %3 = vector.load %arg3[%c0_3, %c0_4] : memref<1x256xf32, #tpu.memory_space<vmem>>, vector<1x256xf32>
    %4 = vector.broadcast %3 : vector<1x256xf32> to vector<16x256xf32>
    %5 = arith.addf %2, %4 : vector<16x256xf32>
    %6 = vector.extract_strided_slice %5 {offsets = [0, 0], sizes = [16, 128], strides = [1, 1]} : vector<16x256xf32> to vector<16x128xf32>
    %7 = vector.extract_strided_slice %5 {offsets = [0, 128], sizes = [16, 128], strides = [1, 1]} : vector<16x256xf32> to vector<16x128xf32>
    %8 = arith.negf %7 : vector<16x128xf32>
    %9 = math.exp %8 : vector<16x128xf32>
    %cst_5 = arith.constant 1.000000e+00 : f32
    %10 = vector.broadcast %cst_5 : f32 to vector<16x128xf32>
    %11 = arith.addf %10, %9 : vector<16x128xf32>
    %12 = arith.divf %10, %11 : vector<16x128xf32>
    %13 = arith.mulf %7, %12 : vector<16x128xf32>
    %14 = arith.mulf %6, %13 : vector<16x128xf32>
    %c0_6 = arith.constant 0 : index
    %c0_7 = arith.constant 0 : index
    %15 = vector.load %arg4[%c0_6, %c0_7] : memref<128x128xf32, #tpu.memory_space<vmem>>, vector<128x128xf32>
    %cst_8 = arith.constant dense<0.000000e+00> : vector<16x128xf32>
    %16 = tpu.matmul %14, %15, %cst_8 {dimension_numbers = #tpu.dot_dimension_numbers<[1], [0], [0], [1], [0, 0, 1, 1], [], []>} : vector<16x128xf32>, vector<128x128xf32>, vector<16x128xf32> -> vector<16x128xf32>
    %c0_9 = arith.constant 0 : index
    %c0_10 = arith.constant 0 : index
    %17 = vector.load %arg5[%c0_9, %c0_10] : memref<1x128xf32, #tpu.memory_space<vmem>>, vector<1x128xf32>
    %18 = vector.broadcast %17 : vector<1x128xf32> to vector<16x128xf32>
    %19 = arith.addf %16, %18 : vector<16x128xf32>
    %c0_11 = arith.constant 0 : index
    %c0_12 = arith.constant 0 : index
    %20 = vector.load %arg6[%c0_11, %c0_12] : memref<16x128xf32, #tpu.memory_space<vmem>>, vector<16x128xf32>
    tpu.vector_store %arg6[%c0_11, %c0_12], %19 {strides = array<i32>} : memref<16x128xf32, #tpu.memory_space<vmem>>, vector<16x128xf32>,
    return
  }
  func.func @transform_0(%arg0: i32) -> (i32, i32) {
    %c0_i32 = arith.constant 0 : i32
    %c0_i32_0 = arith.constant 0 : i32
    return %arg0, %c0_i32 : i32, i32
  }
  func.func @transform_1(%arg0: i32) -> (i32, i32) {
    %c0_i32 = arith.constant 0 : i32
    %c0_i32_0 = arith.constant 0 : i32
    %c0_i32_1 = arith.constant 0 : i32
    return %c0_i32, %c0_i32_0 : i32, i32
  }
  func.func @transform_2(%arg0: i32) -> (i32, i32) {
    %c0_i32 = arith.constant 0 : i32
    %c0_i32_0 = arith.constant 0 : i32
    %c0_i32_1 = arith.constant 0 : i32
    return %c0_i32, %c0_i32_0 : i32, i32
  }
  func.func @transform_3(%arg0: i32) -> (i32, i32) {
    %c0_i32 = arith.constant 0 : i32
    %c0_i32_0 = arith.constant 0 : i32
    %c0_i32_1 = arith.constant 0 : i32
    return %c0_i32, %c0_i32_0 : i32, i32
  }
  func.func @transform_4(%arg0: i32) -> (i32, i32) {
    %c0_i32 = arith.constant 0 : i32
    %c0_i32_0 = arith.constant 0 : i32
    %c0_i32_1 = arith.constant 0 : i32
    return %c0_i32, %c0_i32_0 : i32, i32
  }
  func.func @transform_5(%arg0: i32) -> (i32, i32) {
    %c0_i32 = arith.constant 0 : i32
    %c0_i32_0 = arith.constant 0 : i32
    return %arg0, %c0_i32 : i32, i32
  }
}

</mosaic_0001>

<llo_original>
// kernel: tpu_custom_call.1
$region0: #{tpu_custom_call.1}
  #allocation0 [shape = 'u32[]', space=smem, size = 0x4, offset = 0x4, fixed_abs, tag = 'smem constant byte address 0x4 - core index']
  #allocation1 [shape = 'u32[144,128]{1,0:T(1,128)}', space=vmem, size = 0x12000, scoped, tag = 'internal scratch']
  %s0 = inlined_call_operand.hbm [shape: f32[16,32], index: 0, kind: input, shape index: {}]
  %s1 = inlined_call_operand.hbm [shape: f32[32,256], index: 1, kind: input, shape index: {}]
  %s2 = inlined_call_operand.vmem [shape: f32[1,256], index: 2, kind: input, shape index: {}]
  %s3 = inlined_call_operand.hbm [shape: f32[128,128], index: 3, kind: input, shape index: {}]
  %s4 = inlined_call_operand.vmem [shape: f32[1,128], index: 4, kind: input, shape index: {}]
  %s5 = inlined_call_operand.hbm [shape: f32[16,128], index: 5, kind: output, shape index: {}]
  %s6 = sld [smem:[#allocation0]]
  $region42: #{tpu_custom_call.1} parent=0
    _
  %s8 = ssub.s32 1, %s6
  %s9 = scalar_select 0, %s8, %s6
  $region1: #{tpu_custom_call.1} parent=0
    #allocation2 [shape = 'u8[8192]{0}', space=vmem, size = 0x2000, scoped, tag = 'input window, operand 0, single buffered']
    #allocation3 [shape = 's32[1]{0}', space=sflag, size = 0x4, scoped, tag = 'scoped memory for tpu_custom_call.1']
    #allocation4 [shape = 's32[1]{0}', space=sflag, size = 0x4, scoped, tag = 'scoped memory for tpu_custom_call.1']
    #allocation5 [shape = 'u8[32768]{0}', space=vmem, size = 0x8000, scoped, tag = 'input window, operand 1, single buffered']
    #allocation6 [shape = 's32[1]{0}', space=sflag, size = 0x4, scoped, tag = 'scoped memory for tpu_custom_call.1']
    #allocation7 [shape = 'u8[65536]{0}', space=vmem, size = 0x10000, scoped, tag = 'input window, operand 3, single buffered']
    #allocation8 [shape = 'u8[8192]{0}', space=vmem, size = 0x2000, scoped, tag = 'output window, operand 0, single buffered']
    %10 = vsyncpa [#allocation3], 0
    %11 = vsyncpa [#allocation6], 0
    %12 = vsyncpa [#allocation4], 0
    // Predicated region
    $region2: #{tpu_custom_call.1} parent=1 // pred_check
      _
    $region3: #{tpu_custom_call.1} parent=1 // pred_check_branch
      %14 = sbr.rel (0) target = $region5
    $region4: #{tpu_custom_call.1} parent=1 // pred_region
      %s16 = ssub.s32 256, 256
      %17 = vsyncadd [#allocation3], %s16
      %s18 = sshll.u32 [#allocation2], 4
      %s19 = int_to_ptr.vmem [resolvable:$true] %s18
      %24 = dma.hbm_to_vmem [thread:$0]  %s0, 256, %s19, [#allocation3], 128, 128, 8
    $region5: #{tpu_custom_call.1} parent=1 // pred_fallthru
      _
    // Predicated region
    $region6: #{tpu_custom_call.1} parent=1 // pred_check
      _
    $region7: #{tpu_custom_call.1} parent=1 // pred_check_branch
      %26 = sbr.rel (0) target = $region9
    $region8: #{tpu_custom_call.1} parent=1 // pred_region
      %s28 = ssub.s32 1024, 1024
      %29 = vsyncadd [#allocation6], %s28
      %s30 = sshll.u32 [#allocation5], 4
      %s31 = int_to_ptr.vmem [resolvable:$true] %s30
      %36 = dma.hbm_to_vmem [thread:$0]  %s1, 1024, %s31, [#allocation6], 256, 256, 16
    $region9: #{tpu_custom_call.1} parent=1 // pred_fallthru
      _
    // Predicated region
    $region10: #{tpu_custom_call.1} parent=1 // pred_check
      _
    $region11: #{tpu_custom_call.1} parent=1 // pred_check_branch
      %38 = sbr.rel (0) target = $region13
    $region12: #{tpu_custom_call.1} parent=1 // pred_region
      _
    $region13: #{tpu_custom_call.1} parent=1 // pred_fallthru
      _
    // Predicated region
    $region14: #{tpu_custom_call.1} parent=1 // pred_check
      _
    $region15: #{tpu_custom_call.1} parent=1 // pred_check_branch
      %40 = sbr.rel (0) target = $region17
    $region16: #{tpu_custom_call.1} parent=1 // pred_region
      %s42 = ssub.s32 2048, 2048
      %43 = vsyncadd [#allocation6], %s42
      %s44 = sshll.u32 [#allocation7], 4
      %s45 = int_to_ptr.vmem [resolvable:$true] %s44
      %50 = dma.hbm_to_vmem [thread:$0]  %s3, 2048, %s45, [#allocation6], 128, 128, 8
    $region17: #{tpu_custom_call.1} parent=1 // pred_fallthru
      _
    // Predicated region
    $region18: #{tpu_custom_call.1} parent=1 // pred_check
      _
    $region19: #{tpu_custom_call.1} parent=1 // pred_check_branch
      %52 = sbr.rel (0) target = $region21
    $region20: #{tpu_custom_call.1} parent=1 // pred_region
      _
    $region21: #{tpu_custom_call.1} parent=1 // pred_fallthru
      _
    // Predicated region
    $region22: #{tpu_custom_call.1} parent=1 // pred_check
      _
    $region23: #{tpu_custom_call.1} parent=1 // pred_check_branch
      %54 = sbr.rel (0) target = $region25
    $region24: #{tpu_custom_call.1} parent=1 // pred_region
      %55 = dma.done [#allocation3], 256
    $region25: #{tpu_custom_call.1} parent=1 // pred_fallthru
      _
    // Predicated region
    $region26: #{tpu_custom_call.1} parent=1 // pred_check
      _
    $region27: #{tpu_custom_call.1} parent=1 // pred_check_branch
      %57 = sbr.rel (0) target = $region29
    $region28: #{tpu_custom_call.1} parent=1 // pred_region
      %58 = dma.done [#allocation6], 1024
    $region29: #{tpu_custom_call.1} parent=1 // pred_fallthru
      _
    // Predicated region
    $region30: #{tpu_custom_call.1} parent=1 // pred_check
      _
    $region31: #{tpu_custom_call.1} parent=1 // pred_check_branch
      %60 = sbr.rel (0) target = $region33
    $region32: #{tpu_custom_call.1} parent=1 // pred_region
      %61 = dma.done [#allocation6], 2048
    $region33: #{tpu_custom_call.1} parent=1 // pred_fallthru
      _
    %v62 = vld [vmem:[#allocation2] sm:$0xff]
    %v63 = vld [vmem:[#allocation2 + $0x8] sm:$0xff]
    %v64 = vld [vmem:[#allocation5] sm:$0xff]
    %v65 = vld [vmem:[#allocation5 + $0x8] sm:$0xff]
    %v66 = vld [vmem:[#allocation5 + $0x10] sm:$0xff]
    %v67 = vld [vmem:[#allocation5 + $0x18] sm:$0xff]
    %v68 = vld [vmem:[#allocation5 + $0x20] sm:$0xff]
    %v69 = vld [vmem:[#allocation5 + $0x28] sm:$0xff]
    %v70 = vld [vmem:[#allocation5 + $0x30] sm:$0xff]
    %v71 = vld [vmem:[#allocation5 + $0x38] sm:$0xff]
    %v72 = vld [vmem:[%s2] sm:$0x3]
    %v74 = vlaneseq
    %v75 = vshrl.u32 %v74, 7
    %v76 = vsub.s32 0, %v75
    %v77 = vrot.slane %v72, %v76
    %v78 = vlaneseq
    %v79 = vshrl.u32 %v78, 7
    %v80 = vsub.s32 1, %v79
    %v81 = vrot.slane %v72, %v80
    %vm84 = vcmask 261120
    %v86 = vsel %vm84, %v62, 0
    %v89 = vsel %vm84, %v63, 0
    %91 = vmatprep.subr.mxu0 %v65
    %92 = vmatpush1.msra.mxu0 %v64
    %93 = vmatprep.subr.mxu0 %v67
    %94 = vmatpush1.msra.mxu0 %v66
    %95 = vmatprep.subr.mxu0 %v69
    %96 = vmatpush1.msra.mxu0 %v68
    %97 = vmatprep.subr.mxu0 %v71
    %98 = vmatpush1.msra.mxu0 %v70
    %99 = vmatprep.subr.mxu0 0.0
    %100 = vmatpush1.msra.mxu0 0.0
    %101 = vmatprep.subr.mxu0 0.0
    %102 = vmatpush1.msra.mxu0 0.0
    %103 = vmatprep.subr.mxu0 0.0
    %104 = vmatpush1.msra.mxu0 0.0
    %105 = vmatprep.subr.mxu0 0.0
    %106 = vmatpush1.msra.mxu0 0.0
    %107 = vmatprep.subr.mxu0 0.0
    %108 = vmatpush1.msra.mxu0 0.0
    %109 = vmatprep.subr.mxu0 0.0
    %110 = vmatpush1.msra.mxu0 0.0
    %111 = vmatprep.subr.mxu0 0.0
    %112 = vmatpush1.msra.mxu0 0.0
    %113 = vmatprep.subr.mxu0 0.0
    %114 = vmatpush1.msra.mxu0 0.0
    %115 = vmatprep.subr.mxu0 0.0
    %116 = vmatpush1.msra.mxu0 0.0
    %117 = vmatprep.subr.mxu0 0.0
    %118 = vmatpush1.msra.mxu0 0.0
    %119 = vmatprep.subr.mxu0 0.0
    %120 = vmatpush1.msra.mxu0 0.0
    %121 = vmatprep.subr.mxu0 0.0
    %122 = vmatpush1.msra.mxu0 0.0
    %123 = vmatprep.subr.mxu0 0.0
    %124 = vmatpush1.msra.mxu0 0.0
    %125 = vmatprep.subr.mxu0 0.0
    %126 = vmatpush1.msra.mxu0 0.0
    %127 = vmatprep.subr.mxu0 0.0
    %128 = vmatpush1.msra.mxu0 0.0
    %129 = vmatprep.subr.mxu0 0.0
    %130 = vmatpush1.msra.mxu0 0.0
    %131 = vmatprep.subr.mxu0 0.0
    %132 = vmatpush1.msra.mxu0 0.0
    %133 = vmatprep.subr.mxu0 0.0
    %134 = vmatpush1.msra.mxu0 0.0
    %135 = vmatprep.subr.mxu0 0.0
    %136 = vmatpush1.msra.mxu0 0.0
    %137 = vmatprep.subr.mxu0 0.0
    %138 = vmatpush1.msra.mxu0 0.0
    %139 = vmatprep.subr.mxu0 0.0
    %140 = vmatpush1.msra.mxu0 0.0
    %141 = vmatprep.subr.mxu0 0.0
    %142 = vmatpush1.msra.mxu0 0.0
    %143 = vmatprep.subr.mxu0 0.0
    %144 = vmatpush1.msra.mxu0 0.0
    %145 = vmatprep.subr.mxu0 0.0
    %146 = vmatpush1.msra.mxu0 0.0
    %147 = vmatprep.subr.mxu0 0.0
    %148 = vmatpush1.msra.mxu0 0.0
    %149 = vmatprep.subr.mxu0 0.0
    %150 = vmatpush1.msra.mxu0 0.0
    %151 = vmatprep.subr.mxu0 0.0
    %152 = vmatpush1.msra.mxu0 0.0
    %153 = vmatprep.subr.mxu0 0.0
    %154 = vmatpush1.msra.mxu0 0.0
    %155 = vmatprep.mubr.f32.mxu0 0.0
    %156 = vmatmul.mubr.f32.gmra.mrb[0].mxu0 %v86
    %v157 = vpop.f32.mrb[0].mxu0
    %v158 = vadd.f32 %v77, %v157
    %v159 = vpop.f32.mrb[0].mxu0
    %v160 = vadd.f32 %v81, %v159
    %161 = vmatprep.mubr.f32.mxu0 0.0
    %162 = vmatmul.mubr.f32.gmra.mrb[0].mxu0 %v89
    %v163 = vpop.f32.mrb[0].mxu0
    %v164 = vadd.f32 %v77, %v163
    %v165 = vpop.f32.mrb[0].mxu0
    %v166 = vadd.f32 %v81, %v165
    %167 = vdwg.mxu0
    %v168 = vxor.u32 %v160, 2147483648
    %v169 = vxor.u32 %v166, 2147483648
    %v170 = vmul.f32 %v168, 1.442695
    %v171 = vpow.pop %v170
    %v172 = vmul.f32 %v169, 1.442695
    %v173 = vpow.pop %v172
    %v174 = vadd.f32 %v171, 1.0
    %v175 = vadd.f32 %v173, 1.0
    %v176 = vrcp.pop %v174
    %v177 = vmul.f32 1.0, %v176
    %v178 = vrcp.pop %v175
    %v179 = vmul.f32 1.0, %v178
    %v180 = vmul.f32 %v160, %v177
    %v181 = vmul.f32 %v166, %v179
    %v182 = vmul.f32 %v158, %v180
    %v183 = vmul.f32 %v164, %v181
    %v184 = vld [vmem:[#allocation7] sm:$0xff]
    %v185 = vld [vmem:[#allocation7 + $0x8] sm:$0xff]
    %v186 = vld [vmem:[#allocation7 + $0x10] sm:$0xff]
    %v187 = vld [vmem:[#allocation7 + $0x18] sm:$0xff]
    %v188 = vld [vmem:[#allocation7 + $0x20] sm:$0xff]
    %v189 = vld [vmem:[#allocation7 + $0x28] sm:$0xff]
    %v190 = vld [vmem:[#allocation7 + $0x30] sm:$0xff]
    %v191 = vld [vmem:[#allocation7 + $0x38] sm:$0xff]
    %v192 = vld [vmem:[#allocation7 + $0x40] sm:$0xff]
    %v193 = vld [vmem:[#allocation7 + $0x48] sm:$0xff]
    %v194 = vld [vmem:[#allocation7 + $0x50] sm:$0xff]
    %v195 = vld [vmem:[#allocation7 + $0x58] sm:$0xff]
    %v196 = vld [vmem:[#allocation7 + $0x60] sm:$0xff]
    %v197 = vld [vmem:[#allocation7 + $0x68] sm:$0xff]
    %v198 = vld [vmem:[#allocation7 + $0x70] sm:$0xff]
    %v199 = vld [vmem:[#allocation7 + $0x78] sm:$0xff]
    %v200 = vld [vmem:[%s4] sm:$0x1]
    %v202 = vlaneseq
    %v203 = vshrl.u32 %v202, 7
    %v204 = vsub.s32 0, %v203
    %v205 = vrot.slane %v200, %v204
    %207 = vmatprep.subr.mxu0 0.0
    %208 = vmatpush1.msra.mxu0 %v184
    %209 = vmatprep.subr.mxu0 0.0
    %210 = vmatpush1.msra.mxu0 %v185
    %211 = vmatprep.subr.mxu0 0.0
    %212 = vmatpush1.msra.mxu0 %v186
    %213 = vmatprep.subr.mxu0 0.0
    %214 = vmatpush1.msra.mxu0 %v187
    %215 = vmatprep.subr.mxu0 0.0
    %216 = vmatpush1.msra.mxu0 %v188
    %217 = vmatprep.subr.mxu0 0.0
    %218 = vmatpush1.msra.mxu0 %v189
    %219 = vmatprep.subr.mxu0 0.0
    %220 = vmatpush1.msra.mxu0 %v190
    %221 = vmatprep.subr.mxu0 0.0
    %222 = vmatpush1.msra.mxu0 %v191
    %223 = vmatprep.subr.mxu0 0.0
    %224 = vmatpush1.msra.mxu0 %v192
    %225 = vmatprep.subr.mxu0 0.0
    %226 = vmatpush1.msra.mxu0 %v193
    %227 = vmatprep.subr.mxu0 0.0
    %228 = vmatpush1.msra.mxu0 %v194
    %229 = vmatprep.subr.mxu0 0.0
    %230 = vmatpush1.msra.mxu0 %v195
    %231 = vmatprep.subr.mxu0 0.0
    %232 = vmatpush1.msra.mxu0 %v196
    %233 = vmatprep.subr.mxu0 0.0
    %234 = vmatpush1.msra.mxu0 %v197
    %235 = vmatprep.subr.mxu0 0.0
    %236 = vmatpush1.msra.mxu0 %v198
    %237 = vmatprep.subr.mxu0 0.0
    %238 = vmatpush1.msra.mxu0 %v199
    %239 = vmatprep.subr.mxu0 0.0
    %240 = vmatpush1.msra.mxu0 0.0
    %241 = vmatprep.subr.mxu0 0.0
    %242 = vmatpush1.msra.mxu0 0.0
    %243 = vmatprep.subr.mxu0 0.0
    %244 = vmatpush1.msra.mxu0 0.0
    %245 = vmatprep.subr.mxu0 0.0
    %246 = vmatpush1.msra.mxu0 0.0
    %247 = vmatprep.subr.mxu0 0.0
    %248 = vmatpush1.msra.mxu0 0.0
    %249 = vmatprep.subr.mxu0 0.0
    %250 = vmatpush1.msra.mxu0 0.0
    %251 = vmatprep.subr.mxu0 0.0
    %252 = vmatpush1.msra.mxu0 0.0
    %253 = vmatprep.subr.mxu0 0.0
    %254 = vmatpush1.msra.mxu0 0.0
    %255 = vmatprep.subr.mxu0 0.0
    %256 = vmatpush1.msra.mxu0 0.0
    %257 = vmatprep.subr.mxu0 0.0
    %258 = vmatpush1.msra.mxu0 0.0
    %259 = vmatprep.subr.mxu0 0.0
    %260 = vmatpush1.msra.mxu0 0.0
    %261 = vmatprep.subr.mxu0 0.0
    %262 = vmatpush1.msra.mxu0 0.0
    %263 = vmatprep.subr.mxu0 0.0
    %264 = vmatpush1.msra.mxu0 0.0
    %265 = vmatprep.subr.mxu0 0.0
    %266 = vmatpush1.msra.mxu0 0.0
    %267 = vmatprep.subr.mxu0 0.0
    %268 = vmatpush1.msra.mxu0 0.0
    %269 = vmatprep.subr.mxu0 0.0
    %270 = vmatpush1.msra.mxu0 0.0
    %271 = vmatprep.mubr.f32.mxu0 0.0
    %272 = vmatmul.mubr.f32.gmra.mrb[0].mxu0 %v182
    %v273 = vpop.f32.mrb[0].mxu0
    %v274 = vadd.f32 %v205, %v273
    %v275 = vpop.f32.mrb[0].mxu0
    %276 = vmatprep.mubr.f32.mxu0 0.0
    %277 = vmatmul.mubr.f32.gmra.mrb[0].mxu0 %v183
    %v278 = vpop.f32.mrb[0].mxu0
    %v279 = vadd.f32 %v205, %v278
    %v280 = vpop.f32.mrb[0].mxu0
    %281 = vdwg.mxu0
    %282 = vst [vmem:[#allocation8] sm:$0xff] %v274
    %283 = vst [vmem:[#allocation8 + $0x8] sm:$0xff] %v279
    // Predicated region
    $region34: #{tpu_custom_call.1} parent=1 // pred_check
      _
    $region35: #{tpu_custom_call.1} parent=1 // pred_check_branch
      %285 = sbr.rel (0) target = $region37
    $region36: #{tpu_custom_call.1} parent=1 // pred_region
      %s287 = ssub.s32 256, 256
      %288 = vsyncadd [#allocation4], %s287
      %s289 = sshll.u32 [#allocation8], 4
      %s290 = int_to_ptr.vmem [resolvable:$true] %s289
      %295 = dma.vmem_to_hbm [thread:$0]  %s290, 256, %s5, [#allocation4], 128, 128, 8
    $region37: #{tpu_custom_call.1} parent=1 // pred_fallthru
      _
    // Predicated region
    $region38: #{tpu_custom_call.1} parent=1 // pred_check
      _
    $region39: #{tpu_custom_call.1} parent=1 // pred_check_branch
      %297 = sbr.rel (0) target = $region41
    $region40: #{tpu_custom_call.1} parent=1 // pred_region
      %298 = dma.done [#allocation4], 256
    $region41: #{tpu_custom_call.1} parent=1 // pred_fallthru
      _
    %299 = vsyncpa [#allocation3], 1
    %300 = vsyncpa [#allocation6], 1
    %301 = vsyncpa [#allocation4], 1

</llo_original>
